<compile_context>
chip_gen: v7x
topology: tpu7x:2x2x1
jax: 0.10.0
libtpu: 0.0.40
codegen_flags: <defaults>
</compile_context>

<pallas_src>
import functools

import jax
import jax.numpy as jnp
from jax.experimental import pallas as pl
from jax.experimental.pallas import tpu as pltpu

KH, KW = 5, 5
C_OUT = 30
C_IN = 1


def _round_up(x, m):
    return (x + m - 1) // m * m


def _srm_conv_kernel(x_ref, w_ref, o_ref, *, nb, w_img, l_out):
    # x_ref: (NB, 1, LP)   flattened + zero-padded image rows (lane-dense)
    # w_ref: (30, 26)      flattened SRM filters with bias folded in as col 25
    # o_ref: (NB, 30, LOUT) full-width flattened output rows (lane-dense)
    w = w_ref[...]  # (30, 26), loaded once per grid step
    ones_row = jnp.ones((1, l_out), dtype=jnp.float32)  # hoisted bias row

    for i in range(nb):  # static unroll over the batch block
        row = x_ref[i]  # (1, LP)
        taps = []
        for kh in range(KH):
            for kw in range(KW):
                off = kh * w_img + kw
                taps.append(row[:, off:off + l_out])  # (1, LOUT) lane shift
        taps.append(ones_row)  # bias row
        patches = jnp.concatenate(taps, axis=0)  # (26, LOUT)

        # (30, 26) @ (26, LOUT) on the MXU, exact f32 (HIGHEST avoids the
        # default bf16-pass matmul; SRM values like k/12 are inexact in bf16).
        out = jnp.dot(
            w, patches,
            preferred_element_type=jnp.float32,
            precision=jax.lax.Precision.HIGHEST,
        )
        o_ref[i] = out.astype(o_ref.dtype)


def srm_conv2d(x, weight, bias, *, block_n=None):
    """x: (N, 1, H, W); weight: (30, 1, 5, 5); bias: (30,). Returns (N, 30, H-4, W-4)."""
    N, C, H, W = x.shape
    assert C == C_IN
    OH, OW = H - KH + 1, W - KW + 1

    LOUT = OH * W                        # full-width flattened output length per image
    PAD = (KH - 1) * W + (KW - 1)        # halo so every tap slice stays in bounds
    LP = _round_up(H * W + PAD, 128)     # lane-dense padded input row length

    # Fold bias into the filter bank: K = 25 taps + 1 ones column.
    w26 = jnp.concatenate(
        [weight.reshape(C_OUT, KH * KW), bias.reshape(C_OUT, 1)], axis=1
    ).astype(jnp.float32)

    if block_n is None:
        # Keep >= 2 grid steps when possible (v7x dual TC) while amortizing
        # per-step pipeline overhead; clamp so the double-buffered working set
        # stays well under v5e's scoped-VMEM default.
        block_n = 1 if N <= 2 else min(8, max(1, N // 2))
        per_img = 4 * (2 * LP + 2 * C_OUT * LOUT + 26 * LOUT)
        while block_n > 1 and block_n * per_img > 8 * 1024 * 1024:
            block_n //= 2
    G = pl.cdiv(N, block_n)
    NP = G * block_n

    # Flatten each image row-major (free reshape in HBM) + one cheap zero pad.
    xf = x.reshape(N, 1, H * W).astype(jnp.float32)
    xf = jnp.pad(xf, ((0, NP - N), (0, 0), (0, LP - H * W)))

    kern = functools.partial(_srm_conv_kernel, nb=block_n, w_img=W, l_out=LOUT)
    out_full = pl.pallas_call(
        kern,
        out_shape=jax.ShapeDtypeStruct((NP, C_OUT, LOUT), jnp.float32),
        grid=(G,),
        in_specs=[
            pl.BlockSpec((block_n, 1, LP), lambda g: (g, 0, 0)),
            pl.BlockSpec((C_OUT, KH * KW + 1), lambda g: (0, 0)),
        ],
        out_specs=pl.BlockSpec((block_n, C_OUT, LOUT), lambda g: (g, 0, 0)),
        compiler_params=pltpu.CompilerParams(
            dimension_semantics=("parallel",),
            vmem_limit_bytes=32 * 1024 * 1024,
        ),
    )(xf, w26)

    # (NP, 30, OH*W) -> (N, 30, OH, OW): reshape is metadata-only; the slice
    # drops the garbage right-hand columns of the full-width formulation.
    return out_full[:N].reshape(N, C_OUT, OH, W)[:, :, :, :OW]


if __name__ == "__main__":
    key = jax.random.PRNGKey(0)
    kx, kw, kb = jax.random.split(key, 3)

    # Small example consistent with the module: N=2, C=1, H=W=16 -> (2, 30, 12, 12).
    x = jax.random.normal(kx, (2, 1, 16, 16), dtype=jnp.float32)

    # TODO(synk): real SRM filter bank values come from SRM_Kernels.npy; synthesized here.
    weight = jax.random.normal(kw, (C_OUT, C_IN, KH, KW), dtype=jnp.float32)
    # Module zeroes the bias in reset_parameters(); use a nonzero one here to
    # exercise the folded-bias path (it is a trainable Parameter in general).
    bias = 0.1 * jax.random.normal(kb, (C_OUT,), dtype=jnp.float32)

    out = srm_conv2d(x, weight, bias)
    out = jax.block_until_ready(out)

    # Cross-check against XLA's conv (same semantics as F.conv2d, NCHW/OIHW, VALID).
    ref = jax.lax.conv_general_dilated(
        x, weight, window_strides=(1, 1), padding="VALID",
        dimension_numbers=("NCHW", "OIHW", "NCHW"),
        precision=jax.lax.Precision.HIGHEST,
    ) + bias.reshape(1, C_OUT, 1, 1)

    assert out.shape == (2, C_OUT, 12, 12), out.shape
    err = float(jnp.max(jnp.abs(out - ref)))
    assert jnp.allclose(out, ref, atol=1e-3, rtol=1e-3), err

    print("KERNEL_OK")
</pallas_src>

<mosaic_0001>
module attributes {stable_mosaic.version = 11 : i64} {
  func.func @_srm_conv_kernel(%arg0: i32, %arg1: memref<1x1x384xf32, #tpu.memory_space<vmem>>, %arg2: memref<30x26xf32, #tpu.memory_space<vmem>>, %arg3: memref<1x30x192xf32, #tpu.memory_space<vmem>>) attributes {dimension_semantics = [#tpu.dimension_semantics<parallel>], iteration_bounds = array<i64: 2>, scalar_prefetch = 0 : i64, scratch_operands = 0 : i64, tpu.core_type = #tpu.core_type<tc>, window_params = [{transform_indices = @transform_0, window_bounds = array<i64: 1, 1, 384>}, {pipeline_mode = #tpu.pipeline_mode<synchronous>, transform_indices = @transform_1, window_bounds = array<i64: 30, 26>}, {transform_indices = @transform_2, window_bounds = array<i64: 1, 30, 192>}]} {
    %c0 = arith.constant 0 : index
    %c0_0 = arith.constant 0 : index
    %0 = vector.load %arg2[%c0, %c0_0] : memref<30x26xf32, #tpu.memory_space<vmem>>, vector<30x26xf32>
    %cst = arith.constant 1.000000e+00 : f32
    %1 = vector.broadcast %cst : f32 to vector<1x192xf32>
    %c0_1 = arith.constant 0 : index
    %c0_2 = arith.constant 0 : index
    %c0_3 = arith.constant 0 : index
    %2 = vector.load %arg1[%c0_1, %c0_2, %c0_3] : memref<1x1x384xf32, #tpu.memory_space<vmem>>, vector<1x1x384xf32>
    %3 = vector.shape_cast %2 : vector<1x1x384xf32> to vector<1x384xf32>
    %4 = vector.extract_strided_slice %3 {offsets = [0, 0], sizes = [1, 192], strides = [1, 1]} : vector<1x384xf32> to vector<1x192xf32>
    %5 = vector.extract_strided_slice %3 {offsets = [0, 1], sizes = [1, 192], strides = [1, 1]} : vector<1x384xf32> to vector<1x192xf32>
    %6 = vector.extract_strided_slice %3 {offsets = [0, 2], sizes = [1, 192], strides = [1, 1]} : vector<1x384xf32> to vector<1x192xf32>
    %7 = vector.extract_strided_slice %3 {offsets = [0, 3], sizes = [1, 192], strides = [1, 1]} : vector<1x384xf32> to vector<1x192xf32>
    %8 = vector.extract_strided_slice %3 {offsets = [0, 4], sizes = [1, 192], strides = [1, 1]} : vector<1x384xf32> to vector<1x192xf32>
    %9 = vector.extract_strided_slice %3 {offsets = [0, 16], sizes = [1, 192], strides = [1, 1]} : vector<1x384xf32> to vector<1x192xf32>
    %10 = vector.extract_strided_slice %3 {offsets = [0, 17], sizes = [1, 192], strides = [1, 1]} : vector<1x384xf32> to vector<1x192xf32>
    %11 = vector.extract_strided_slice %3 {offsets = [0, 18], sizes = [1, 192], strides = [1, 1]} : vector<1x384xf32> to vector<1x192xf32>
    %12 = vector.extract_strided_slice %3 {offsets = [0, 19], sizes = [1, 192], strides = [1, 1]} : vector<1x384xf32> to vector<1x192xf32>
    %13 = vector.extract_strided_slice %3 {offsets = [0, 20], sizes = [1, 192], strides = [1, 1]} : vector<1x384xf32> to vector<1x192xf32>
    %14 = vector.extract_strided_slice %3 {offsets = [0, 32], sizes = [1, 192], strides = [1, 1]} : vector<1x384xf32> to vector<1x192xf32>
    %15 = vector.extract_strided_slice %3 {offsets = [0, 33], sizes = [1, 192], strides = [1, 1]} : vector<1x384xf32> to vector<1x192xf32>
    %16 = vector.extract_strided_slice %3 {offsets = [0, 34], sizes = [1, 192], strides = [1, 1]} : vector<1x384xf32> to vector<1x192xf32>
    %17 = vector.extract_strided_slice %3 {offsets = [0, 35], sizes = [1, 192], strides = [1, 1]} : vector<1x384xf32> to vector<1x192xf32>
    %18 = vector.extract_strided_slice %3 {offsets = [0, 36], sizes = [1, 192], strides = [1, 1]} : vector<1x384xf32> to vector<1x192xf32>
    %19 = vector.extract_strided_slice %3 {offsets = [0, 48], sizes = [1, 192], strides = [1, 1]} : vector<1x384xf32> to vector<1x192xf32>
    %20 = vector.extract_strided_slice %3 {offsets = [0, 49], sizes = [1, 192], strides = [1, 1]} : vector<1x384xf32> to vector<1x192xf32>
    %21 = vector.extract_strided_slice %3 {offsets = [0, 50], sizes = [1, 192], strides = [1, 1]} : vector<1x384xf32> to vector<1x192xf32>
    %22 = vector.extract_strided_slice %3 {offsets = [0, 51], sizes = [1, 192], strides = [1, 1]} : vector<1x384xf32> to vector<1x192xf32>
    %23 = vector.extract_strided_slice %3 {offsets = [0, 52], sizes = [1, 192], strides = [1, 1]} : vector<1x384xf32> to vector<1x192xf32>
    %24 = vector.extract_strided_slice %3 {offsets = [0, 64], sizes = [1, 192], strides = [1, 1]} : vector<1x384xf32> to vector<1x192xf32>
    %25 = vector.extract_strided_slice %3 {offsets = [0, 65], sizes = [1, 192], strides = [1, 1]} : vector<1x384xf32> to vector<1x192xf32>
    %26 = vector.extract_strided_slice %3 {offsets = [0, 66], sizes = [1, 192], strides = [1, 1]} : vector<1x384xf32> to vector<1x192xf32>
    %27 = vector.extract_strided_slice %3 {offsets = [0, 67], sizes = [1, 192], strides = [1, 1]} : vector<1x384xf32> to vector<1x192xf32>
    %28 = vector.extract_strided_slice %3 {offsets = [0, 68], sizes = [1, 192], strides = [1, 1]} : vector<1x384xf32> to vector<1x192xf32>
    %29 = tpu.concatenate %4, %5, %6, %7, %8, %9, %10, %11, %12, %13, %14, %15, %16, %17, %18, %19 in 0 : vector<1x192xf32>, vector<1x192xf32>, vector<1x192xf32>, vector<1x192xf32>, vector<1x192xf32>, vector<1x192xf32>, vector<1x192xf32>, vector<1x192xf32>, vector<1x192xf32>, vector<1x192xf32>, vector<1x192xf32>, vector<1x192xf32>, vector<1x192xf32>, vector<1x192xf32>, vector<1x192xf32>, vector<1x192xf32> -> vector<16x192xf32>
    %30 = tpu.concatenate %20, %21, %22, %23, %24, %25, %26, %27, %28, %1 in 0 : vector<1x192xf32>, vector<1x192xf32>, vector<1x192xf32>, vector<1x192xf32>, vector<1x192xf32>, vector<1x192xf32>, vector<1x192xf32>, vector<1x192xf32>, vector<1x192xf32>, vector<1x192xf32> -> vector<10x192xf32>
    %31 = tpu.concatenate %29, %30 in 0 : vector<16x192xf32>, vector<10x192xf32> -> vector<26x192xf32>
    %cst_4 = arith.constant dense<0.000000e+00> : vector<30x192xf32>
    %32 = tpu.matmul %0, %31, %cst_4 {dimension_numbers = #tpu.dot_dimension_numbers<[1], [0], [0], [1], [0, 0, 1, 1], [], []>, precision = #tpu.contract_precision<fp32>} : vector<30x26xf32>, vector<26x192xf32>, vector<30x192xf32> -> vector<30x192xf32>
    %c0_5 = arith.constant 0 : index
    %c0_6 = arith.constant 0 : index
    %c0_7 = arith.constant 0 : index
    %33 = vector.load %arg3[%c0_5, %c0_6, %c0_7] : memref<1x30x192xf32, #tpu.memory_space<vmem>>, vector<1x30x192xf32>
    %34 = vector.shape_cast %33 : vector<1x30x192xf32> to vector<30x192xf32>
    %35 = vector.shape_cast %32 : vector<30x192xf32> to vector<1x30x192xf32>
    tpu.vector_store %arg3[%c0_5, %c0_6, %c0_7], %35 {strides = array<i32>} : memref<1x30x192xf32, #tpu.memory_space<vmem>>, vector<1x30x192xf32>,
    return
  }
  func.func @transform_0(%arg0: i32) -> (i32, i32, i32) {
    %c0_i32 = arith.constant 0 : i32
    %c0_i32_0 = arith.constant 0 : i32
    %c0_i32_1 = arith.constant 0 : i32
    return %arg0, %c0_i32, %c0_i32_0 : i32, i32, i32
  }
  func.func @transform_1(%arg0: i32) -> (i32, i32) {
    %c0_i32 = arith.constant 0 : i32
    %c0_i32_0 = arith.constant 0 : i32
    %c0_i32_1 = arith.constant 0 : i32
    return %c0_i32, %c0_i32_0 : i32, i32
  }
  func.func @transform_2(%arg0: i32) -> (i32, i32, i32) {
    %c0_i32 = arith.constant 0 : i32
    %c0_i32_0 = arith.constant 0 : i32
    %c0_i32_1 = arith.constant 0 : i32
    return %arg0, %c0_i32, %c0_i32_0 : i32, i32, i32
  }
}

</mosaic_0001>

<llo_original>
// kernel: tpu_custom_call.1
$region0: #{tpu_custom_call.1}
  #allocation0 [shape = 'u32[]', space=smem, size = 0x4, offset = 0x4, fixed_abs, tag = 'smem constant byte address 0x4 - core index']
  #allocation1 [shape = 'u32[144,128]{1,0:T(1,128)}', space=vmem, size = 0x12000, scoped, tag = 'internal scratch']
  %s0 = inlined_call_operand.hbm [shape: f32[2,1,384], index: 0, kind: input, shape index: {}]
  %s1 = inlined_call_operand.hbm [shape: f32[30,26], index: 1, kind: input, shape index: {}]
  %s2 = inlined_call_operand.vmem [shape: f32[2,30,192], index: 2, kind: output, shape index: {}]
  %s3 = sld [smem:[#allocation0]]
  $region49: #{tpu_custom_call.1} parent=0
    _
  %s5 = ssub.s32 1, %s3
  %s6 = scalar_select 0, %s5, %s3
  $region1: #{tpu_custom_call.1} parent=0
    #allocation2 [shape = 'u8[3072]{0}', space=vmem, size = 0xc00, scoped, tag = 'input window, operand 0']
    #allocation3 [shape = 's32[2]{0}', space=sflag, size = 0x8, scoped, tag = 'scoped memory for tpu_custom_call.1']
    #allocation4 [shape = 'u8[16384]{0}', space=vmem, size = 0x4000, scoped, tag = 'input window, operand 1, single buffered']
    #allocation5 [shape = 's32[1]{0}', space=sflag, size = 0x4, scoped, tag = 'scoped memory for tpu_custom_call.1']
    %7 = vsyncpa [#allocation3], 0
    %s8 = scalar_lea.sflag [#allocation3], 1
    %9 = vsyncpa %s8, 0
    %10 = vsyncpa [#allocation5], 0
    loop: start=0, step=1, limit=4
    $region2: #{tpu_custom_call.1} parent=1 // loop_pre_header
      _
    $region3: #{tpu_custom_call.1} parent=1 // loop_header
      %s12 = sphi 0, %s16
      %p13 = scmp.ge.s32.totalorder %s12, 4
      %s22 = sphi 0, %s24
      %s25 = sphi 0, %s22
      %s26 = sphi 0, %s25
      %s42 = sphi 0, %s26
      %s46 = sphi 0, %s46
      %s48 = sphi 0, %s46
      %s49 = sphi 0, %s48
      %s63 = sphi 0, %s49
      %s69 = sphi 0, %s71
      %s72 = sphi 0, %s69
      %s73 = sphi 0, %s72
      %s89 = sphi 0, %s73
    $region4: #{tpu_custom_call.1} parent=1 // loop_header_branch
      %15 = sbr.rel (%p13) target = $region8
    $region5: #{tpu_custom_call.1} parent=1 // loop_body
      %s17 = ssub.s32 %s12, 1
      %s18 = ssub.s32 %s12, 2
      %s19 = sadd.s32 %s12, 1
      %s20 = ssub.s32 %s12, %s19
      %p21 = scmp.eq.s32.totalorder %s20, 0
      %s23 = sadd.s32 %s22, 1
      %s24 = scalar_select %p21, %s22, %s23
      %p27 = pneg %p21
      %p28 = scmp.eq.s32.totalorder %s12, 1
      %p29 = por %p27, %p28
      %p30 = scmp.ne.s32.totalorder %s22, %s25
      %p31 = scmp.eq.s32.totalorder %s12, 0
      %p32 = por %p30, %p31
      %p33 = scmp.ne.s32.totalorder %s22, %s25
      %p34 = scmp.eq.s32.totalorder %s17, 1
      %p35 = por %p33, %p34
      %p36 = scmp.ne.s32.totalorder %s25, %s26
      %p37 = scmp.eq.s32.totalorder %s17, 0
      %p38 = por %p36, %p37
      %p39 = scmp.ne.s32.totalorder %s25, %s26
      %p40 = scmp.eq.s32.totalorder %s18, 1
      %p41 = por %p39, %p40
      %p43 = scmp.ne.s32.totalorder %s26, %s42
      %p44 = scmp.eq.s32.totalorder %s18, 0
      %p45 = por %p43, %p44
      %s47 = sadd.s32 %s46, 1
      %p50 = scmp.eq.s32.totalorder %s12, 1
      %p51 = scmp.ne.s32.totalorder %s46, %s48
      %p52 = scmp.eq.s32.totalorder %s12, 0
      %p53 = por %p51, %p52
      %p54 = scmp.ne.s32.totalorder %s46, %s48
      %p55 = scmp.eq.s32.totalorder %s17, 1
      %p56 = por %p54, %p55
      %p57 = scmp.ne.s32.totalorder %s48, %s49
      %p58 = scmp.eq.s32.totalorder %s17, 0
      %p59 = por %p57, %p58
      %p60 = scmp.ne.s32.totalorder %s48, %s49
      %p61 = scmp.eq.s32.totalorder %s18, 1
      %p62 = por %p60, %p61
      %p64 = scmp.ne.s32.totalorder %s49, %s63
      %p65 = scmp.eq.s32.totalorder %s18, 0
      %p66 = por %p64, %p65
      %s67 = ssub.s32 %s12, %s19
      %p68 = scmp.eq.s32.totalorder %s67, 0
      %s70 = sadd.s32 %s69, 1
      %s71 = scalar_select %p68, %s69, %s70
      %p74 = pneg %p68
      %p75 = scmp.eq.s32.totalorder %s12, 1
      %p76 = por %p74, %p75
      %p77 = scmp.ne.s32.totalorder %s69, %s72
      %p78 = scmp.eq.s32.totalorder %s12, 0
      %p79 = por %p77, %p78
      %p80 = scmp.ne.s32.totalorder %s69, %s72
      %p81 = scmp.eq.s32.totalorder %s17, 1
      %p82 = por %p80, %p81
      %p83 = scmp.ne.s32.totalorder %s72, %s73
      %p84 = scmp.eq.s32.totalorder %s17, 0
      %p85 = por %p83, %p84
      %p86 = scmp.ne.s32.totalorder %s72, %s73
      %p87 = scmp.eq.s32.totalorder %s18, 1
      %p88 = por %p86, %p87
      %p90 = scmp.ne.s32.totalorder %s73, %s89
      %p91 = scmp.eq.s32.totalorder %s18, 0
      %p92 = por %p90, %p91
      %p93 = scmp.le.s32.totalorder 1, %s12
      %p94 = scmp.lt.s32.totalorder %s12, 3
      %p95 = pnand %p93, %p94
      %p96 = pneg %p95
      // Predicated region
      $region9: #{tpu_custom_call.1} parent=5 // pred_check
        _
      $region10: #{tpu_custom_call.1} parent=5 // pred_check_branch
        %98 = sbr.rel (%p95) target = $region12
      $region11: #{tpu_custom_call.1} parent=5 // pred_region
        %s99 = ssub.s32 %s12, 1
        // Predicated region
        $region13: #{tpu_custom_call.1} parent=11 // pred_check
          %p100 = pneg %p59
        $region14: #{tpu_custom_call.1} parent=11 // pred_check_branch
          %102 = sbr.rel (%p100) target = $region16
        $region15: #{tpu_custom_call.1} parent=11 // pred_region
          %s104 = ssub.s32 512, 512
          %105 = vsyncadd [#allocation5], %s104
          %s106 = sshll.u32 [#allocation4], 4
          %s107 = int_to_ptr.vmem [resolvable:$true] %s106
          %112 = dma.hbm_to_vmem [thread:$0]  %s1, 512, %s107, [#allocation5], 128, 128, 8
        $region16: #{tpu_custom_call.1} parent=11 // pred_fallthru
          _
      $region12: #{tpu_custom_call.1} parent=5 // pred_fallthru
        _
      %p113 = scmp.lt.s32.totalorder %s12, 2
      // Predicated region
      $region17: #{tpu_custom_call.1} parent=5 // pred_check
        %p114 = pneg %p113
      $region18: #{tpu_custom_call.1} parent=5 // pred_check_branch
        %116 = sbr.rel (%p114) target = $region20
      $region19: #{tpu_custom_call.1} parent=5 // pred_region
        // Predicated region
        $region21: #{tpu_custom_call.1} parent=19 // pred_check
          %p117 = pneg %p32
        $region22: #{tpu_custom_call.1} parent=19 // pred_check_branch
          %119 = sbr.rel (%p117) target = $region24
        $region23: #{tpu_custom_call.1} parent=19 // pred_region
          %s120 = sand.u32 %s22, 1
          %s121 = scalar_lea.sflag [#allocation3], %s120
          %s122 = sand.u32 %s22, 1
          %s123 = smul.addr %s122, 3
          %s124 = scalar_lea.vmem [#allocation2], %s123
          %s126 = ssub.s32 48, 48
          %127 = vsyncadd %s121, %s126
          %s128 = smul.addr %s12, 3
          %s129 = smul.addr %s128, 16
          %s130 = scalar_lea.hbm %s0, %s129
          %s132 = sshll.u32 %s124, 4
          %s133 = int_to_ptr.vmem [resolvable:$true] %s132
          %135 = dma.hbm_to_vmem [thread:$0]  %s130, 48, %s133, %s121
        $region24: #{tpu_custom_call.1} parent=19 // pred_fallthru
          _
      $region20: #{tpu_custom_call.1} parent=5 // pred_fallthru
        _
      %p136 = scmp.le.s32.totalorder 1, %s12
      %p137 = scmp.lt.s32.totalorder %s12, 3
      %p138 = pnand %p136, %p137
      %p139 = pneg %p138
      // Predicated region
      $region25: #{tpu_custom_call.1} parent=5 // pred_check
        _
      $region26: #{tpu_custom_call.1} parent=5 // pred_check_branch
        %141 = sbr.rel (%p138) target = $region28
      $region27: #{tpu_custom_call.1} parent=5 // pred_region
        %s142 = ssub.s32 %s12, 1
        %s143 = sand.u32 %s25, 1
        %s144 = scalar_lea.sflag [#allocation3], %s143
        %s145 = sand.u32 %s25, 1
        %s146 = smul.addr %s145, 3
        %s147 = scalar_lea.vmem [#allocation2], %s146
        // Predicated region
        $region29: #{tpu_custom_call.1} parent=27 // pred_check
          %p148 = pneg %p38
        $region30: #{tpu_custom_call.1} parent=27 // pred_check_branch
          %150 = sbr.rel (%p148) target = $region32
        $region31: #{tpu_custom_call.1} parent=27 // pred_region
          %151 = dma.done %s144, 48
        $region32: #{tpu_custom_call.1} parent=27 // pred_fallthru
          _
        // Predicated region
        $region33: #{tpu_custom_call.1} parent=27 // pred_check
          %p152 = pneg %p59
        $region34: #{tpu_custom_call.1} parent=27 // pred_check_branch
          %154 = sbr.rel (%p152) target = $region36
        $region35: #{tpu_custom_call.1} parent=27 // pred_region
          %155 = dma.done [#allocation5], 512
        $region36: #{tpu_custom_call.1} parent=27 // pred_fallthru
          _
        %s156 = sand.u32 %s25, 1
        %s157 = scalar_lea.sflag [#allocation3], %s156
        %s158 = sand.u32 %s25, 1
        %s159 = smul.addr %s158, 3
        %s160 = scalar_lea.vmem [#allocation2], %s159
        %p161 = pneg %p38
        %p162 = pneg %p35
        %p163 = pneg %p59
        %p164 = pneg %p56
        %p165 = pneg %p85
        %p166 = pneg %p82
        %p167 = scmp.lt.s32.totalorder %s17, 1
        %s168 = scalar_select %p167, %s17, 1
        %s169 = smul.addr %s168, 8
        %s170 = smul.addr %s169, 8
        %s171 = scalar_lea.vmem %s2, %s170
        %p172 = scmp.lt.s32.totalorder %s17, 1
        %s173 = scalar_select %p172, %s17, 1
        %s174 = smul.addr %s173, 8
        %s175 = smul.addr %s174, 8
        %s176 = scalar_lea.vmem %s2, %s175
        %v177 = vld [vmem:[#allocation4] sm:$0xff]
        %v178 = vld [vmem:[#allocation4 + $0x8] sm:$0xff]
        %v179 = vld [vmem:[#allocation4 + $0x10] sm:$0xff]
        %v180 = vld [vmem:[#allocation4 + $0x18] sm:$0x3f]
        %v181 = vld [vmem:[%s147] sm:$0x7]
        %v183 = vlaneseq
        %v184 = vshrl.u32 %v183, 7
        %v185 = vsub.s32 0, %v184
        %v186 = vrot.slane %v181, %v185
        %v187 = vlaneseq
        %v188 = vshrl.u32 %v187, 7
        %v189 = vsub.s32 1, %v188
        %v190 = vrot.slane %v181, %v189
        %193 = vrot.lane.b32.xlu0 %v186, 127
        %v194 = vpop.permute.xlu0 %193
        %195 = vrot.lane.b32.xlu0 %v190, 127
        %v196 = vpop.permute.xlu0 %195
        %vm197 = vcmask 1039360
        %v198 = vsel %vm197, %v194, %v196
        %201 = vrot.lane.b32.xlu0 %v186, 126
        %v202 = vpop.permute.xlu0 %201
        %203 = vrot.lane.b32.xlu0 %v190, 126
        %v204 = vpop.permute.xlu0 %203
        %vm205 = vcmask 1031168
        %v206 = vsel %vm205, %v202, %v204
        %209 = vrot.lane.b32.xlu0 %v186, 125
        %v210 = vpop.permute.xlu0 %209
        %211 = vrot.lane.b32.xlu0 %v190, 125
        %v212 = vpop.permute.xlu0 %211
        %vm213 = vcmask 1022976
        %v214 = vsel %vm213, %v210, %v212
        %217 = vrot.lane.b32.xlu0 %v186, 124
        %v218 = vpop.permute.xlu0 %217
        %219 = vrot.lane.b32.xlu0 %v190, 124
        %v220 = vpop.permute.xlu0 %219
        %vm221 = vcmask 1014784
        %v222 = vsel %vm221, %v218, %v220
        %225 = vrot.lane.b32.xlu0 %v186, 112
        %v226 = vpop.permute.xlu0 %225
        %227 = vrot.lane.b32.xlu0 %v190, 112
        %v228 = vpop.permute.xlu0 %227
        %vm229 = vcmask 916480
        %v230 = vsel %vm229, %v226, %v228
        %233 = vrot.lane.b32.xlu0 %v186, 111
        %v234 = vpop.permute.xlu0 %233
        %235 = vrot.lane.b32.xlu0 %v190, 111
        %v236 = vpop.permute.xlu0 %235
        %vm237 = vcmask 908288
        %v238 = vsel %vm237, %v234, %v236
        %241 = vrot.lane.b32.xlu0 %v186, 110
        %v242 = vpop.permute.xlu0 %241
        %243 = vrot.lane.b32.xlu0 %v190, 110
        %v244 = vpop.permute.xlu0 %243
        %vm245 = vcmask 900096
        %v246 = vsel %vm245, %v242, %v244
        %249 = vrot.lane.b32.xlu0 %v186, 109
        %v250 = vpop.permute.xlu0 %249
        %251 = vrot.lane.b32.xlu0 %v190, 109
        %v252 = vpop.permute.xlu0 %251
        %vm253 = vcmask 891904
        %v254 = vsel %vm253, %v250, %v252
        %257 = vrot.lane.b32.xlu0 %v186, 108
        %v258 = vpop.permute.xlu0 %257
        %259 = vrot.lane.b32.xlu0 %v190, 108
        %v260 = vpop.permute.xlu0 %259
        %vm261 = vcmask 883712
        %v262 = vsel %vm261, %v258, %v260
        %265 = vrot.lane.b32.xlu0 %v186, 96
        %v266 = vpop.permute.xlu0 %265
        %267 = vrot.lane.b32.xlu0 %v190, 96
        %v268 = vpop.permute.xlu0 %267
        %vm269 = vcmask 785408
        %v270 = vsel %vm269, %v266, %v268
        %273 = vrot.lane.b32.xlu0 %v186, 95
        %v274 = vpop.permute.xlu0 %273
        %275 = vrot.lane.b32.xlu0 %v190, 95
        %v276 = vpop.permute.xlu0 %275
        %vm277 = vcmask 777216
        %v278 = vsel %vm277, %v274, %v276
        %281 = vrot.lane.b32.xlu0 %v186, 94
        %v282 = vpop.permute.xlu0 %281
        %283 = vrot.lane.b32.xlu0 %v190, 94
        %v284 = vpop.permute.xlu0 %283
        %vm285 = vcmask 769024
        %v286 = vsel %vm285, %v282, %v284
        %289 = vrot.lane.b32.xlu0 %v186, 93
        %v290 = vpop.permute.xlu0 %289
        %291 = vrot.lane.b32.xlu0 %v190, 93
        %v292 = vpop.permute.xlu0 %291
        %vm293 = vcmask 760832
        %v294 = vsel %vm293, %v290, %v292
        %297 = vrot.lane.b32.xlu0 %v186, 92
        %v298 = vpop.permute.xlu0 %297
        %299 = vrot.lane.b32.xlu0 %v190, 92
        %v300 = vpop.permute.xlu0 %299
        %vm301 = vcmask 752640
        %v302 = vsel %vm301, %v298, %v300
        %305 = vrot.lane.b32.xlu0 %v186, 80
        %v306 = vpop.permute.xlu0 %305
        %307 = vrot.lane.b32.xlu0 %v190, 80
        %v308 = vpop.permute.xlu0 %307
        %vm309 = vcmask 654336
        %v310 = vsel %vm309, %v306, %v308
        %vm313 = vcmask 1040384
        %v314 = vsel %vm313, %v186, %v198
        %v315 = vsel %vm313, %v190, %v196
        %vm316 = vcmask 1041408
        %v317 = vsel %vm316, %v314, %v206
        %v318 = vsel %vm316, %v315, %v204
        %vm319 = vcmask 1042432
        %v320 = vsel %vm319, %v317, %v214
        %v321 = vsel %vm319, %v318, %v212
        %vm322 = vcmask 1043456
        %v323 = vsel %vm322, %v320, %v222
        %v324 = vsel %vm322, %v321, %v220
        %vm325 = vcmask 1044480
        %v326 = vsel %vm325, %v323, %v230
        %v327 = vsel %vm325, %v324, %v228
        %vm328 = vcmask 1045504
        %v329 = vsel %vm328, %v326, %v238
        %v330 = vsel %vm328, %v327, %v236
        %vm331 = vcmask 1046528
        %v332 = vsel %vm331, %v329, %v246
        %v333 = vsel %vm331, %v330, %v244
        %v334 = vsel %vm313, %v254, %v262
        %v335 = vsel %vm313, %v252, %v260
        %v336 = vsel %vm316, %v334, %v270
        %v337 = vsel %vm316, %v335, %v268
        %v338 = vsel %vm319, %v336, %v278
        %v339 = vsel %vm319, %v337, %v276
        %v340 = vsel %vm322, %v338, %v286
        %v341 = vsel %vm322, %v339, %v284
        %v342 = vsel %vm325, %v340, %v294
        %v343 = vsel %vm325, %v341, %v292
        %v344 = vsel %vm328, %v342, %v302
        %v345 = vsel %vm328, %v343, %v300
        %v346 = vsel %vm331, %v344, %v310
        %v347 = vsel %vm331, %v345, %v308
        %348 = vrot.lane.b32.xlu0 %v186, 113
        %v349 = vpop.permute.xlu0 %348
        %350 = vrot.lane.b32.xlu0 %v190, 113
        %v351 = vpop.permute.xlu0 %350
        %vm352 = vcmask 924672
        %v353 = vsel %vm352, %v349, %v351
        %v356 = vlaneseq
        %v357 = vshrl.u32 %v356, 7
        %v358 = vsub.s32 2, %v357
        %v359 = vrot.slane %v181, %v358
        %360 = vrot.lane.b32.xlu0 %v359, 112
        %v361 = vpop.permute.xlu0 %360
        %v362 = vsel %vm229, %v228, %v361
        %364 = vrot.lane.b32.xlu0 %v359, 111
        %v365 = vpop.permute.xlu0 %364
        %v366 = vsel %vm237, %v236, %v365
        %368 = vrot.lane.b32.xlu0 %v359, 110
        %v369 = vpop.permute.xlu0 %368
        %v370 = vsel %vm245, %v244, %v369
        %372 = vrot.lane.b32.xlu0 %v359, 109
        %v373 = vpop.permute.xlu0 %372
        %v374 = vsel %vm253, %v252, %v373
        %v376 = vsel %vm322, %v320, %v353
        %v377 = vsel %vm322, %v321, %v351
        %v378 = vsel %vm325, %v376, %v230
        %v379 = vsel %vm325, %v377, %v362
        %v380 = vsel %vm328, %v378, %v238
        %v381 = vsel %vm328, %v379, %v366
        %v382 = vsel %vm331, %v380, %v246
        %v383 = vsel %vm331, %v381, %v370
        %v384 = vsel %vm313, %v254, 1.0
        %v385 = vsel %vm313, %v374, 1.0
        %390 = vrot.lane.b32.xlu0 %v382, 79
        %v391 = vpop.permute.xlu0 %390
        %392 = vrot.lane.b32.xlu0 %v383, 79
        %v393 = vpop.permute.xlu0 %392
        %394 = vrot.lane.b32.xlu0 %v384, 79
        %v395 = vpop.permute.xlu0 %394
        %396 = vrot.lane.b32.xlu0 %v385, 79
        %v397 = vpop.permute.xlu0 %396
        %vm398 = vcmask 646144
        %v399 = vsel %vm398, %v391, %v393
        %v400 = vsel %vm398, %v395, %v397
        %vm403 = vcmask 211968
        %v405 = vsel %vm403, %v177, 0
        %v408 = vsel %vm403, %v178, 0
        %v411 = vsel %vm403, %v179, 0
        %v414 = vsel %vm403, %v180, 0
        %v416 = vsel %vm316, %v400, 0
        %v418 = vsel %vm316, %v397, 0
        %v420 = vand.u32 %v333, 4294901760
        %421 = vmatprep.subr.mxu0 %v420
        %v422 = vand.u32 %v332, 4294901760
        %423 = vmatpush1.msra.mxu0 %v422
        %v424 = vand.u32 %v347, 4294901760
        %425 = vmatprep.subr.mxu0 %v424
        %v426 = vand.u32 %v346, 4294901760
        %427 = vmatpush1.msra.mxu0 %v426
        %v428 = vand.u32 %v393, 4294901760
        %429 = vmatprep.subr.mxu0 %v428
        %v430 = vand.u32 %v399, 4294901760
        %431 = vmatpush1.msra.mxu0 %v430
        %v432 = vand.u32 %v418, 4294901760
        %433 = vmatprep.subr.mxu0 %v432
        %v434 = vand.u32 %v416, 4294901760
        %435 = vmatpush1.msra.mxu0 %v434
        %436 = vmatprep.subr.mxu0 0.0
        %437 = vmatpush1.msra.mxu0 0.0
        %438 = vmatprep.subr.mxu0 0.0
        %439 = vmatpush1.msra.mxu0 0.0
        %440 = vmatprep.subr.mxu0 0.0
        %441 = vmatpush1.msra.mxu0 0.0
        %442 = vmatprep.subr.mxu0 0.0
        %443 = vmatpush1.msra.mxu0 0.0
        %444 = vmatprep.subr.mxu0 0.0
        %445 = vmatpush1.msra.mxu0 0.0
        %446 = vmatprep.subr.mxu0 0.0
        %447 = vmatpush1.msra.mxu0 0.0
        %448 = vmatprep.subr.mxu0 0.0
        %449 = vmatpush1.msra.mxu0 0.0
        %450 = vmatprep.subr.mxu0 0.0
        %451 = vmatpush1.msra.mxu0 0.0
        %452 = vmatprep.subr.mxu0 0.0
        %453 = vmatpush1.msra.mxu0 0.0
        %454 = vmatprep.subr.mxu0 0.0
        %455 = vmatpush1.msra.mxu0 0.0
        %456 = vmatprep.subr.mxu0 0.0
        %457 = vmatpush1.msra.mxu0 0.0
        %458 = vmatprep.subr.mxu0 0.0
        %459 = vmatpush1.msra.mxu0 0.0
        %460 = vmatprep.subr.mxu0 0.0
        %461 = vmatpush1.msra.mxu0 0.0
        %462 = vmatprep.subr.mxu0 0.0
        %463 = vmatpush1.msra.mxu0 0.0
        %464 = vmatprep.subr.mxu0 0.0
        %465 = vmatpush1.msra.mxu0 0.0
        %466 = vmatprep.subr.mxu0 0.0
        %467 = vmatpush1.msra.mxu0 0.0
        %468 = vmatprep.subr.mxu0 0.0
        %469 = vmatpush1.msra.mxu0 0.0
        %470 = vmatprep.subr.mxu0 0.0
        %471 = vmatpush1.msra.mxu0 0.0
        %472 = vmatprep.subr.mxu0 0.0
        %473 = vmatpush1.msra.mxu0 0.0
        %474 = vmatprep.subr.mxu0 0.0
        %475 = vmatpush1.msra.mxu0 0.0
        %476 = vmatprep.subr.mxu0 0.0
        %477 = vmatpush1.msra.mxu0 0.0
        %478 = vmatprep.subr.mxu0 0.0
        %479 = vmatpush1.msra.mxu0 0.0
        %480 = vmatprep.subr.mxu0 0.0
        %481 = vmatpush1.msra.mxu0 0.0
        %482 = vmatprep.subr.mxu0 0.0
        %483 = vmatpush1.msra.mxu0 0.0
        %484 = vmatprep.subr.mxu0 0.0
        %485 = vmatpush1.msra.mxu0 0.0
        %486 = vmatprep.subr.mxu0 0.0
        %487 = vmatpush1.msra.mxu0 0.0
        %488 = vmatprep.subr.mxu0 0.0
        %489 = vmatpush1.msra.mxu0 0.0
        %490 = vmatprep.subr.mxu0 0.0
        %491 = vmatpush1.msra.mxu0 0.0
        %492 = vmatprep.mubr.f32.mxu0 0.0
        %v493 = vand.u32 %v405, 4294901760
        %v494 = vsub.f32 %v405, %v493
        %v495 = vand.u32 %v494, 4294901760
        %v496 = vsub.f32 %v494, %v495
        %v497 = vand.u32 %v496, 4294901760
        %498 = vmatmul.mubr.f32.gmra.mrb[0].mxu0 %v497
        %v499 = vpop.f32.mrb[0].mxu0
        %v500 = vadd.f32 0.0, %v499
        %v501 = vpop.f32.mrb[0].mxu0
        %v502 = vadd.f32 0.0, %v501
        %503 = vmatprep.mubr.f32.mxu0 0.0
        %v504 = vand.u32 %v408, 4294901760
        %v505 = vsub.f32 %v408, %v504
        %v506 = vand.u32 %v505, 4294901760
        %v507 = vsub.f32 %v505, %v506
        %v508 = vand.u32 %v507, 4294901760
        %509 = vmatmul.mubr.f32.gmra.mrb[0].mxu0 %v508
        %v510 = vpop.f32.mrb[0].mxu0
        %v511 = vadd.f32 0.0, %v510
        %v512 = vpop.f32.mrb[0].mxu0
        %v513 = vadd.f32 0.0, %v512
        %514 = vmatprep.mubr.f32.mxu0 0.0
        %v515 = vand.u32 %v411, 4294901760
        %v516 = vsub.f32 %v411, %v515
        %v517 = vand.u32 %v516, 4294901760
        %v518 = vsub.f32 %v516, %v517
        %v519 = vand.u32 %v518, 4294901760
        %520 = vmatmul.mubr.f32.gmra.mrb[0].mxu0 %v519
        %v521 = vpop.f32.mrb[0].mxu0
        %v522 = vadd.f32 0.0, %v521
        %v523 = vpop.f32.mrb[0].mxu0
        %v524 = vadd.f32 0.0, %v523
        %525 = vmatprep.mubr.f32.mxu0 0.0
        %v526 = vand.u32 %v414, 4294901760
        %v527 = vsub.f32 %v414, %v526
        %v528 = vand.u32 %v527, 4294901760
        %v529 = vsub.f32 %v527, %v528
        %v530 = vand.u32 %v529, 4294901760
        %531 = vmatmul.mubr.f32.gmra.mrb[0].mxu0 %v530
        %v532 = vpop.f32.mrb[0].mxu0
        %v533 = vadd.f32 0.0, %v532
        %v534 = vpop.f32.mrb[0].mxu0
        %v535 = vadd.f32 0.0, %v534
        %536 = vdwg.mxu0
        %v537 = vand.u32 %v333, 4294901760
        %v538 = vsub.f32 %v333, %v537
        %v539 = vand.u32 %v538, 4294901760
        %v540 = vsub.f32 %v538, %v539
        %v541 = vand.u32 %v540, 4294901760
        %542 = vmatprep.subr.mxu0 %v541
        %v543 = vand.u32 %v332, 4294901760
        %v544 = vsub.f32 %v332, %v543
        %v545 = vand.u32 %v544, 4294901760
        %v546 = vsub.f32 %v544, %v545
        %v547 = vand.u32 %v546, 4294901760
        %548 = vmatpush1.msra.mxu0 %v547
        %v549 = vand.u32 %v347, 4294901760
        %v550 = vsub.f32 %v347, %v549
        %v551 = vand.u32 %v550, 4294901760
        %v552 = vsub.f32 %v550, %v551
        %v553 = vand.u32 %v552, 4294901760
        %554 = vmatprep.subr.mxu0 %v553
        %v555 = vand.u32 %v346, 4294901760
        %v556 = vsub.f32 %v346, %v555
        %v557 = vand.u32 %v556, 4294901760
        %v558 = vsub.f32 %v556, %v557
        %v559 = vand.u32 %v558, 4294901760
        %560 = vmatpush1.msra.mxu0 %v559
        %v561 = vand.u32 %v393, 4294901760
        %v562 = vsub.f32 %v393, %v561
        %v563 = vand.u32 %v562, 4294901760
        %v564 = vsub.f32 %v562, %v563
        %v565 = vand.u32 %v564, 4294901760
        %566 = vmatprep.subr.mxu0 %v565
        %v567 = vand.u32 %v399, 4294901760
        %v568 = vsub.f32 %v399, %v567
        %v569 = vand.u32 %v568, 4294901760
        %v570 = vsub.f32 %v568, %v569
        %v571 = vand.u32 %v570, 4294901760
        %572 = vmatpush1.msra.mxu0 %v571
        %v573 = vand.u32 %v418, 4294901760
        %v574 = vsub.f32 %v418, %v573
        %v575 = vand.u32 %v574, 4294901760
        %v576 = vsub.f32 %v574, %v575
        %v577 = vand.u32 %v576, 4294901760
        %578 = vmatprep.subr.mxu0 %v577
        %v579 = vand.u32 %v416, 4294901760
        %v580 = vsub.f32 %v416, %v579
        %v581 = vand.u32 %v580, 4294901760
        %v582 = vsub.f32 %v580, %v581
        %v583 = vand.u32 %v582, 4294901760
        %584 = vmatpush1.msra.mxu0 %v583
        %585 = vmatprep.subr.mxu0 0.0
        %586 = vmatpush1.msra.mxu0 0.0
        %587 = vmatprep.subr.mxu0 0.0
        %588 = vmatpush1.msra.mxu0 0.0
        %589 = vmatprep.subr.mxu0 0.0
        %590 = vmatpush1.msra.mxu0 0.0
        %591 = vmatprep.subr.mxu0 0.0
        %592 = vmatpush1.msra.mxu0 0.0
        %593 = vmatprep.subr.mxu0 0.0
        %594 = vmatpush1.msra.mxu0 0.0
        %595 = vmatprep.subr.mxu0 0.0
        %596 = vmatpush1.msra.mxu0 0.0
        %597 = vmatprep.subr.mxu0 0.0
        %598 = vmatpush1.msra.mxu0 0.0
        %599 = vmatprep.subr.mxu0 0.0
        %600 = vmatpush1.msra.mxu0 0.0
        %601 = vmatprep.subr.mxu0 0.0
        %602 = vmatpush1.msra.mxu0 0.0
        %603 = vmatprep.subr.mxu0 0.0
        %604 = vmatpush1.msra.mxu0 0.0
        %605 = vmatprep.subr.mxu0 0.0
        %606 = vmatpush1.msra.mxu0 0.0
        %607 = vmatprep.subr.mxu0 0.0
        %608 = vmatpush1.msra.mxu0 0.0
        %609 = vmatprep.subr.mxu0 0.0
        %610 = vmatpush1.msra.mxu0 0.0
        %611 = vmatprep.subr.mxu0 0.0
        %612 = vmatpush1.msra.mxu0 0.0
        %613 = vmatprep.subr.mxu0 0.0
        %614 = vmatpush1.msra.mxu0 0.0
        %615 = vmatprep.subr.mxu0 0.0
        %616 = vmatpush1.msra.mxu0 0.0
        %617 = vmatprep.subr.mxu0 0.0
        %618 = vmatpush1.msra.mxu0 0.0
        %619 = vmatprep.subr.mxu0 0.0
        %620 = vmatpush1.msra.mxu0 0.0
        %621 = vmatprep.subr.mxu0 0.0
        %622 = vmatpush1.msra.mxu0 0.0
        %623 = vmatprep.subr.mxu0 0.0
        %624 = vmatpush1.msra.mxu0 0.0
        %625 = vmatprep.subr.mxu0 0.0
        %626 = vmatpush1.msra.mxu0 0.0
        %627 = vmatprep.subr.mxu0 0.0
        %628 = vmatpush1.msra.mxu0 0.0
        %629 = vmatprep.subr.mxu0 0.0
        %630 = vmatpush1.msra.mxu0 0.0
        %631 = vmatprep.subr.mxu0 0.0
        %632 = vmatpush1.msra.mxu0 0.0
        %633 = vmatprep.subr.mxu0 0.0
        %634 = vmatpush1.msra.mxu0 0.0
        %635 = vmatprep.subr.mxu0 0.0
        %636 = vmatpush1.msra.mxu0 0.0
        %637 = vmatprep.subr.mxu0 0.0
        %638 = vmatpush1.msra.mxu0 0.0
        %639 = vmatprep.subr.mxu0 0.0
        %640 = vmatpush1.msra.mxu0 0.0
        %641 = vmatprep.mubr.f32.mxu0 0.0
        %v642 = vand.u32 %v405, 4294901760
        %643 = vmatmul.mubr.f32.gmra.mrb[0].mxu0 %v642
        %v644 = vpop.f32.mrb[0].mxu0
        %v645 = vadd.f32 %v500, %v644
        %v646 = vpop.f32.mrb[0].mxu0
        %v647 = vadd.f32 %v502, %v646
        %648 = vmatprep.mubr.f32.mxu0 0.0
        %v649 = vand.u32 %v408, 4294901760
        %650 = vmatmul.mubr.f32.gmra.mrb[0].mxu0 %v649
        %v651 = vpop.f32.mrb[0].mxu0
        %v652 = vadd.f32 %v511, %v651
        %v653 = vpop.f32.mrb[0].mxu0
        %v654 = vadd.f32 %v513, %v653
        %655 = vmatprep.mubr.f32.mxu0 0.0
        %v656 = vand.u32 %v411, 4294901760
        %657 = vmatmul.mubr.f32.gmra.mrb[0].mxu0 %v656
        %v658 = vpop.f32.mrb[0].mxu0
        %v659 = vadd.f32 %v522, %v658
        %v660 = vpop.f32.mrb[0].mxu0
        %v661 = vadd.f32 %v524, %v660
        %662 = vmatprep.mubr.f32.mxu0 0.0
        %v663 = vand.u32 %v414, 4294901760
        %664 = vmatmul.mubr.f32.gmra.mrb[0].mxu0 %v663
        %v665 = vpop.f32.mrb[0].mxu0
        %v666 = vadd.f32 %v533, %v665
        %v667 = vpop.f32.mrb[0].mxu0
        %v668 = vadd.f32 %v535, %v667
        %669 = vdwg.mxu0
        %v670 = vand.u32 %v333, 4294901760
        %v671 = vsub.f32 %v333, %v670
        %672 = vmatprep.subr.mxu0 %v671
        %v673 = vand.u32 %v332, 4294901760
        %v674 = vsub.f32 %v332, %v673
        %675 = vmatpush1.msra.mxu0 %v674
        %v676 = vand.u32 %v347, 4294901760
        %v677 = vsub.f32 %v347, %v676
        %678 = vmatprep.subr.mxu0 %v677
        %v679 = vand.u32 %v346, 4294901760
        %v680 = vsub.f32 %v346, %v679
        %681 = vmatpush1.msra.mxu0 %v680
        %v682 = vand.u32 %v393, 4294901760
        %v683 = vsub.f32 %v393, %v682
        %684 = vmatprep.subr.mxu0 %v683
        %v685 = vand.u32 %v399, 4294901760
        %v686 = vsub.f32 %v399, %v685
        %687 = vmatpush1.msra.mxu0 %v686
        %v688 = vand.u32 %v418, 4294901760
        %v689 = vsub.f32 %v418, %v688
        %690 = vmatprep.subr.mxu0 %v689
        %v691 = vand.u32 %v416, 4294901760
        %v692 = vsub.f32 %v416, %v691
        %693 = vmatpush1.msra.mxu0 %v692
        %694 = vmatprep.subr.mxu0 0.0
        %695 = vmatpush1.msra.mxu0 0.0
        %696 = vmatprep.subr.mxu0 0.0
        %697 = vmatpush1.msra.mxu0 0.0
        %698 = vmatprep.subr.mxu0 0.0
        %699 = vmatpush1.msra.mxu0 0.0
        %700 = vmatprep.subr.mxu0 0.0
        %701 = vmatpush1.msra.mxu0 0.0
        %702 = vmatprep.subr.mxu0 0.0
        %703 = vmatpush1.msra.mxu0 0.0
        %704 = vmatprep.subr.mxu0 0.0
        %705 = vmatpush1.msra.mxu0 0.0
        %706 = vmatprep.subr.mxu0 0.0
        %707 = vmatpush1.msra.mxu0 0.0
        %708 = vmatprep.subr.mxu0 0.0
        %709 = vmatpush1.msra.mxu0 0.0
        %710 = vmatprep.subr.mxu0 0.0
        %711 = vmatpush1.msra.mxu0 0.0
        %712 = vmatprep.subr.mxu0 0.0
        %713 = vmatpush1.msra.mxu0 0.0
        %714 = vmatprep.subr.mxu0 0.0
        %715 = vmatpush1.msra.mxu0 0.0
        %716 = vmatprep.subr.mxu0 0.0
        %717 = vmatpush1.msra.mxu0 0.0
        %718 = vmatprep.subr.mxu0 0.0
        %719 = vmatpush1.msra.mxu0 0.0
        %720 = vmatprep.subr.mxu0 0.0
        %721 = vmatpush1.msra.mxu0 0.0
        %722 = vmatprep.subr.mxu0 0.0
        %723 = vmatpush1.msra.mxu0 0.0
        %724 = vmatprep.subr.mxu0 0.0
        %725 = vmatpush1.msra.mxu0 0.0
        %726 = vmatprep.subr.mxu0 0.0
        %727 = vmatpush1.msra.mxu0 0.0
        %728 = vmatprep.subr.mxu0 0.0
        %729 = vmatpush1.msra.mxu0 0.0
        %730 = vmatprep.subr.mxu0 0.0
        %731 = vmatpush1.msra.mxu0 0.0
        %732 = vmatprep.subr.mxu0 0.0
        %733 = vmatpush1.msra.mxu0 0.0
        %734 = vmatprep.subr.mxu0 0.0
        %735 = vmatpush1.msra.mxu0 0.0
        %736 = vmatprep.subr.mxu0 0.0
        %737 = vmatpush1.msra.mxu0 0.0
        %738 = vmatprep.subr.mxu0 0.0
        %739 = vmatpush1.msra.mxu0 0.0
        %740 = vmatprep.subr.mxu0 0.0
        %741 = vmatpush1.msra.mxu0 0.0
        %742 = vmatprep.subr.mxu0 0.0
        %743 = vmatpush1.msra.mxu0 0.0
        %744 = vmatprep.subr.mxu0 0.0
        %745 = vmatpush1.msra.mxu0 0.0
        %746 = vmatprep.subr.mxu0 0.0
        %747 = vmatpush1.msra.mxu0 0.0
        %748 = vmatprep.subr.mxu0 0.0
        %749 = vmatpush1.msra.mxu0 0.0
        %750 = vmatprep.mubr.f32.mxu0 0.0
        %v751 = vand.u32 %v405, 4294901760
        %v752 = vsub.f32 %v405, %v751
        %753 = vmatmul.mubr.f32.gmra.mrb[0].mxu0 %v752
        %v754 = vpop.f32.mrb[0].mxu0
        %v755 = vadd.f32 %v645, %v754
        %v756 = vpop.f32.mrb[0].mxu0
        %v757 = vadd.f32 %v647, %v756
        %758 = vmatprep.mubr.f32.mxu0 0.0
        %v759 = vand.u32 %v408, 4294901760
        %v760 = vsub.f32 %v408, %v759
        %761 = vmatmul.mubr.f32.gmra.mrb[0].mxu0 %v760
        %v762 = vpop.f32.mrb[0].mxu0
        %v763 = vadd.f32 %v652, %v762
        %v764 = vpop.f32.mrb[0].mxu0
        %v765 = vadd.f32 %v654, %v764
        %766 = vmatprep.mubr.f32.mxu0 0.0
        %v767 = vand.u32 %v411, 4294901760
        %v768 = vsub.f32 %v411, %v767
        %769 = vmatmul.mubr.f32.gmra.mrb[0].mxu0 %v768
        %v770 = vpop.f32.mrb[0].mxu0
        %v771 = vadd.f32 %v659, %v770
        %v772 = vpop.f32.mrb[0].mxu0
        %v773 = vadd.f32 %v661, %v772
        %774 = vmatprep.mubr.f32.mxu0 0.0
        %v775 = vand.u32 %v414, 4294901760
        %v776 = vsub.f32 %v414, %v775
        %777 = vmatmul.mubr.f32.gmra.mrb[0].mxu0 %v776
        %v778 = vpop.f32.mrb[0].mxu0
        %v779 = vadd.f32 %v666, %v778
        %v780 = vpop.f32.mrb[0].mxu0
        %v781 = vadd.f32 %v668, %v780
        %782 = vdwg.mxu0
        %v783 = vand.u32 %v333, 4294901760
        %784 = vmatprep.subr.mxu0 %v783
        %v785 = vand.u32 %v332, 4294901760
        %786 = vmatpush1.msra.mxu0 %v785
        %v787 = vand.u32 %v347, 4294901760
        %788 = vmatprep.subr.mxu0 %v787
        %v789 = vand.u32 %v346, 4294901760
        %790 = vmatpush1.msra.mxu0 %v789
        %v791 = vand.u32 %v393, 4294901760
        %792 = vmatprep.subr.mxu0 %v791
        %v793 = vand.u32 %v399, 4294901760
        %794 = vmatpush1.msra.mxu0 %v793
        %v795 = vand.u32 %v418, 4294901760
        %796 = vmatprep.subr.mxu0 %v795
        %v797 = vand.u32 %v416, 4294901760
        %798 = vmatpush1.msra.mxu0 %v797
        %799 = vmatprep.subr.mxu0 0.0
        %800 = vmatpush1.msra.mxu0 0.0
        %801 = vmatprep.subr.mxu0 0.0
        %802 = vmatpush1.msra.mxu0 0.0
        %803 = vmatprep.subr.mxu0 0.0
        %804 = vmatpush1.msra.mxu0 0.0
        %805 = vmatprep.subr.mxu0 0.0
        %806 = vmatpush1.msra.mxu0 0.0
        %807 = vmatprep.subr.mxu0 0.0
        %808 = vmatpush1.msra.mxu0 0.0
        %809 = vmatprep.subr.mxu0 0.0
        %810 = vmatpush1.msra.mxu0 0.0
        %811 = vmatprep.subr.mxu0 0.0
        %812 = vmatpush1.msra.mxu0 0.0
        %813 = vmatprep.subr.mxu0 0.0
        %814 = vmatpush1.msra.mxu0 0.0
        %815 = vmatprep.subr.mxu0 0.0
        %816 = vmatpush1.msra.mxu0 0.0
        %817 = vmatprep.subr.mxu0 0.0
        %818 = vmatpush1.msra.mxu0 0.0
        %819 = vmatprep.subr.mxu0 0.0
        %820 = vmatpush1.msra.mxu0 0.0
        %821 = vmatprep.subr.mxu0 0.0
        %822 = vmatpush1.msra.mxu0 0.0
        %823 = vmatprep.subr.mxu0 0.0
        %824 = vmatpush1.msra.mxu0 0.0
        %825 = vmatprep.subr.mxu0 0.0
        %826 = vmatpush1.msra.mxu0 0.0
        %827 = vmatprep.subr.mxu0 0.0
        %828 = vmatpush1.msra.mxu0 0.0
        %829 = vmatprep.subr.mxu0 0.0
        %830 = vmatpush1.msra.mxu0 0.0
        %831 = vmatprep.subr.mxu0 0.0
        %832 = vmatpush1.msra.mxu0 0.0
        %833 = vmatprep.subr.mxu0 0.0
        %834 = vmatpush1.msra.mxu0 0.0
        %835 = vmatprep.subr.mxu0 0.0
        %836 = vmatpush1.msra.mxu0 0.0
        %837 = vmatprep.subr.mxu0 0.0
        %838 = vmatpush1.msra.mxu0 0.0
        %839 = vmatprep.subr.mxu0 0.0
        %840 = vmatpush1.msra.mxu0 0.0
        %841 = vmatprep.subr.mxu0 0.0
        %842 = vmatpush1.msra.mxu0 0.0
        %843 = vmatprep.subr.mxu0 0.0
        %844 = vmatpush1.msra.mxu0 0.0
        %845 = vmatprep.subr.mxu0 0.0
        %846 = vmatpush1.msra.mxu0 0.0
        %847 = vmatprep.subr.mxu0 0.0
        %848 = vmatpush1.msra.mxu0 0.0
        %849 = vmatprep.subr.mxu0 0.0
        %850 = vmatpush1.msra.mxu0 0.0
        %851 = vmatprep.subr.mxu0 0.0
        %852 = vmatpush1.msra.mxu0 0.0
        %853 = vmatprep.subr.mxu0 0.0
        %854 = vmatpush1.msra.mxu0 0.0
        %855 = vmatprep.mubr.f32.mxu0 0.0
        %v856 = vand.u32 %v405, 4294901760
        %v857 = vsub.f32 %v405, %v856
        %v858 = vand.u32 %v857, 4294901760
        %859 = vmatmul.mubr.f32.gmra.mrb[0].mxu0 %v858
        %v860 = vpop.f32.mrb[0].mxu0
        %v861 = vadd.f32 %v755, %v860
        %v862 = vpop.f32.mrb[0].mxu0
        %v863 = vadd.f32 %v757, %v862
        %864 = vmatprep.mubr.f32.mxu0 0.0
        %v865 = vand.u32 %v408, 4294901760
        %v866 = vsub.f32 %v408, %v865
        %v867 = vand.u32 %v866, 4294901760
        %868 = vmatmul.mubr.f32.gmra.mrb[0].mxu0 %v867
        %v869 = vpop.f32.mrb[0].mxu0
        %v870 = vadd.f32 %v763, %v869
        %v871 = vpop.f32.mrb[0].mxu0
        %v872 = vadd.f32 %v765, %v871
        %873 = vmatprep.mubr.f32.mxu0 0.0
        %v874 = vand.u32 %v411, 4294901760
        %v875 = vsub.f32 %v411, %v874
        %v876 = vand.u32 %v875, 4294901760
        %877 = vmatmul.mubr.f32.gmra.mrb[0].mxu0 %v876
        %v878 = vpop.f32.mrb[0].mxu0
        %v879 = vadd.f32 %v771, %v878
        %v880 = vpop.f32.mrb[0].mxu0
        %v881 = vadd.f32 %v773, %v880
        %882 = vmatprep.mubr.f32.mxu0 0.0
        %v883 = vand.u32 %v414, 4294901760
        %v884 = vsub.f32 %v414, %v883
        %v885 = vand.u32 %v884, 4294901760
        %886 = vmatmul.mubr.f32.gmra.mrb[0].mxu0 %v885
        %v887 = vpop.f32.mrb[0].mxu0
        %v888 = vadd.f32 %v779, %v887
        %v889 = vpop.f32.mrb[0].mxu0
        %v890 = vadd.f32 %v781, %v889
        %891 = vdwg.mxu0
        %v892 = vand.u32 %v333, 4294901760
        %v893 = vsub.f32 %v333, %v892
        %v894 = vand.u32 %v893, 4294901760
        %895 = vmatprep.subr.mxu0 %v894
        %v896 = vand.u32 %v332, 4294901760
        %v897 = vsub.f32 %v332, %v896
        %v898 = vand.u32 %v897, 4294901760
        %899 = vmatpush1.msra.mxu0 %v898
        %v900 = vand.u32 %v347, 4294901760
        %v901 = vsub.f32 %v347, %v900
        %v902 = vand.u32 %v901, 4294901760
        %903 = vmatprep.subr.mxu0 %v902
        %v904 = vand.u32 %v346, 4294901760
        %v905 = vsub.f32 %v346, %v904
        %v906 = vand.u32 %v905, 4294901760
        %907 = vmatpush1.msra.mxu0 %v906
        %v908 = vand.u32 %v393, 4294901760
        %v909 = vsub.f32 %v393, %v908
        %v910 = vand.u32 %v909, 4294901760
        %911 = vmatprep.subr.mxu0 %v910
        %v912 = vand.u32 %v399, 4294901760
        %v913 = vsub.f32 %v399, %v912
        %v914 = vand.u32 %v913, 4294901760
        %915 = vmatpush1.msra.mxu0 %v914
        %v916 = vand.u32 %v418, 4294901760
        %v917 = vsub.f32 %v418, %v916
        %v918 = vand.u32 %v917, 4294901760
        %919 = vmatprep.subr.mxu0 %v918
        %v920 = vand.u32 %v416, 4294901760
        %v921 = vsub.f32 %v416, %v920
        %v922 = vand.u32 %v921, 4294901760
        %923 = vmatpush1.msra.mxu0 %v922
        %924 = vmatprep.subr.mxu0 0.0
        %925 = vmatpush1.msra.mxu0 0.0
        %926 = vmatprep.subr.mxu0 0.0
        %927 = vmatpush1.msra.mxu0 0.0
        %928 = vmatprep.subr.mxu0 0.0
        %929 = vmatpush1.msra.mxu0 0.0
        %930 = vmatprep.subr.mxu0 0.0
        %931 = vmatpush1.msra.mxu0 0.0
        %932 = vmatprep.subr.mxu0 0.0
        %933 = vmatpush1.msra.mxu0 0.0
        %934 = vmatprep.subr.mxu0 0.0
        %935 = vmatpush1.msra.mxu0 0.0
        %936 = vmatprep.subr.mxu0 0.0
        %937 = vmatpush1.msra.mxu0 0.0
        %938 = vmatprep.subr.mxu0 0.0
        %939 = vmatpush1.msra.mxu0 0.0
        %940 = vmatprep.subr.mxu0 0.0
        %941 = vmatpush1.msra.mxu0 0.0
        %942 = vmatprep.subr.mxu0 0.0
        %943 = vmatpush1.msra.mxu0 0.0
        %944 = vmatprep.subr.mxu0 0.0
        %945 = vmatpush1.msra.mxu0 0.0
        %946 = vmatprep.subr.mxu0 0.0
        %947 = vmatpush1.msra.mxu0 0.0
        %948 = vmatprep.subr.mxu0 0.0
        %949 = vmatpush1.msra.mxu0 0.0
        %950 = vmatprep.subr.mxu0 0.0
        %951 = vmatpush1.msra.mxu0 0.0
        %952 = vmatprep.subr.mxu0 0.0
        %953 = vmatpush1.msra.mxu0 0.0
        %954 = vmatprep.subr.mxu0 0.0
        %955 = vmatpush1.msra.mxu0 0.0
        %956 = vmatprep.subr.mxu0 0.0
        %957 = vmatpush1.msra.mxu0 0.0
        %958 = vmatprep.subr.mxu0 0.0
        %959 = vmatpush1.msra.mxu0 0.0
        %960 = vmatprep.subr.mxu0 0.0
        %961 = vmatpush1.msra.mxu0 0.0
        %962 = vmatprep.subr.mxu0 0.0
        %963 = vmatpush1.msra.mxu0 0.0
        %964 = vmatprep.subr.mxu0 0.0
        %965 = vmatpush1.msra.mxu0 0.0
        %966 = vmatprep.subr.mxu0 0.0
        %967 = vmatpush1.msra.mxu0 0.0
        %968 = vmatprep.subr.mxu0 0.0
        %969 = vmatpush1.msra.mxu0 0.0
        %970 = vmatprep.subr.mxu0 0.0
        %971 = vmatpush1.msra.mxu0 0.0
        %972 = vmatprep.subr.mxu0 0.0
        %973 = vmatpush1.msra.mxu0 0.0
        %974 = vmatprep.subr.mxu0 0.0
        %975 = vmatpush1.msra.mxu0 0.0
        %976 = vmatprep.subr.mxu0 0.0
        %977 = vmatpush1.msra.mxu0 0.0
        %978 = vmatprep.subr.mxu0 0.0
        %979 = vmatpush1.msra.mxu0 0.0
        %980 = vmatprep.mubr.f32.mxu0 0.0
        %v981 = vand.u32 %v405, 4294901760
        %982 = vmatmul.mubr.f32.gmra.mrb[0].mxu0 %v981
        %v983 = vpop.f32.mrb[0].mxu0
        %v984 = vadd.f32 %v861, %v983
        %v985 = vpop.f32.mrb[0].mxu0
        %v986 = vadd.f32 %v863, %v985
        %987 = vmatprep.mubr.f32.mxu0 0.0
        %v988 = vand.u32 %v408, 4294901760
        %989 = vmatmul.mubr.f32.gmra.mrb[0].mxu0 %v988
        %v990 = vpop.f32.mrb[0].mxu0
        %v991 = vadd.f32 %v870, %v990
        %v992 = vpop.f32.mrb[0].mxu0
        %v993 = vadd.f32 %v872, %v992
        %994 = vmatprep.mubr.f32.mxu0 0.0
        %v995 = vand.u32 %v411, 4294901760
        %996 = vmatmul.mubr.f32.gmra.mrb[0].mxu0 %v995
        %v997 = vpop.f32.mrb[0].mxu0
        %v998 = vadd.f32 %v879, %v997
        %v999 = vpop.f32.mrb[0].mxu0
        %v1000 = vadd.f32 %v881, %v999
        %1001 = vmatprep.mubr.f32.mxu0 0.0
        %v1002 = vand.u32 %v414, 4294901760
        %1003 = vmatmul.mubr.f32.gmra.mrb[0].mxu0 %v1002
        %v1004 = vpop.f32.mrb[0].mxu0
        %v1005 = vadd.f32 %v888, %v1004
        %v1006 = vpop.f32.mrb[0].mxu0
        %v1007 = vadd.f32 %v890, %v1006
        %1008 = vdwg.mxu0
        %v1009 = vand.u32 %v333, 4294901760
        %1010 = vmatprep.subr.mxu0 %v1009
        %v1011 = vand.u32 %v332, 4294901760
        %1012 = vmatpush1.msra.mxu0 %v1011
        %v1013 = vand.u32 %v347, 4294901760
        %1014 = vmatprep.subr.mxu0 %v1013
        %v1015 = vand.u32 %v346, 4294901760
        %1016 = vmatpush1.msra.mxu0 %v1015
        %v1017 = vand.u32 %v393, 4294901760
        %1018 = vmatprep.subr.mxu0 %v1017
        %v1019 = vand.u32 %v399, 4294901760
        %1020 = vmatpush1.msra.mxu0 %v1019
        %v1021 = vand.u32 %v418, 4294901760
        %1022 = vmatprep.subr.mxu0 %v1021
        %v1023 = vand.u32 %v416, 4294901760
        %1024 = vmatpush1.msra.mxu0 %v1023
        %1025 = vmatprep.subr.mxu0 0.0
        %1026 = vmatpush1.msra.mxu0 0.0
        %1027 = vmatprep.subr.mxu0 0.0
        %1028 = vmatpush1.msra.mxu0 0.0
        %1029 = vmatprep.subr.mxu0 0.0
        %1030 = vmatpush1.msra.mxu0 0.0
        %1031 = vmatprep.subr.mxu0 0.0
        %1032 = vmatpush1.msra.mxu0 0.0
        %1033 = vmatprep.subr.mxu0 0.0
        %1034 = vmatpush1.msra.mxu0 0.0
        %1035 = vmatprep.subr.mxu0 0.0
        %1036 = vmatpush1.msra.mxu0 0.0
        %1037 = vmatprep.subr.mxu0 0.0
        %1038 = vmatpush1.msra.mxu0 0.0
        %1039 = vmatprep.subr.mxu0 0.0
        %1040 = vmatpush1.msra.mxu0 0.0
        %1041 = vmatprep.subr.mxu0 0.0
        %1042 = vmatpush1.msra.mxu0 0.0
        %1043 = vmatprep.subr.mxu0 0.0
        %1044 = vmatpush1.msra.mxu0 0.0
        %1045 = vmatprep.subr.mxu0 0.0
        %1046 = vmatpush1.msra.mxu0 0.0
        %1047 = vmatprep.subr.mxu0 0.0
        %1048 = vmatpush1.msra.mxu0 0.0
        %1049 = vmatprep.subr.mxu0 0.0
        %1050 = vmatpush1.msra.mxu0 0.0
        %1051 = vmatprep.subr.mxu0 0.0
        %1052 = vmatpush1.msra.mxu0 0.0
        %1053 = vmatprep.subr.mxu0 0.0
        %1054 = vmatpush1.msra.mxu0 0.0
        %1055 = vmatprep.subr.mxu0 0.0
        %1056 = vmatpush1.msra.mxu0 0.0
        %1057 = vmatprep.subr.mxu0 0.0
        %1058 = vmatpush1.msra.mxu0 0.0
        %1059 = vmatprep.subr.mxu0 0.0
        %1060 = vmatpush1.msra.mxu0 0.0
        %1061 = vmatprep.subr.mxu0 0.0
        %1062 = vmatpush1.msra.mxu0 0.0
        %1063 = vmatprep.subr.mxu0 0.0
        %1064 = vmatpush1.msra.mxu0 0.0
        %1065 = vmatprep.subr.mxu0 0.0
        %1066 = vmatpush1.msra.mxu0 0.0
        %1067 = vmatprep.subr.mxu0 0.0
        %1068 = vmatpush1.msra.mxu0 0.0
        %1069 = vmatprep.subr.mxu0 0.0
        %1070 = vmatpush1.msra.mxu0 0.0
        %1071 = vmatprep.subr.mxu0 0.0
        %1072 = vmatpush1.msra.mxu0 0.0
        %1073 = vmatprep.subr.mxu0 0.0
        %1074 = vmatpush1.msra.mxu0 0.0
        %1075 = vmatprep.subr.mxu0 0.0
        %1076 = vmatpush1.msra.mxu0 0.0
        %1077 = vmatprep.subr.mxu0 0.0
        %1078 = vmatpush1.msra.mxu0 0.0
        %1079 = vmatprep.subr.mxu0 0.0
        %1080 = vmatpush1.msra.mxu0 0.0
        %1081 = vmatprep.mubr.f32.mxu0 0.0
        %v1082 = vand.u32 %v405, 4294901760
        %1083 = vmatmul.mubr.f32.gmra.mrb[0].mxu0 %v1082
        %v1084 = vpop.f32.mrb[0].mxu0
        %v1085 = vadd.f32 %v984, %v1084
        %v1086 = vpop.f32.mrb[0].mxu0
        %v1087 = vadd.f32 %v986, %v1086
        %1088 = vmatprep.mubr.f32.mxu0 0.0
        %v1089 = vand.u32 %v408, 4294901760
        %1090 = vmatmul.mubr.f32.gmra.mrb[0].mxu0 %v1089
        %v1091 = vpop.f32.mrb[0].mxu0
        %v1092 = vadd.f32 %v991, %v1091
        %v1093 = vpop.f32.mrb[0].mxu0
        %v1094 = vadd.f32 %v993, %v1093
        %1095 = vmatprep.mubr.f32.mxu0 0.0
        %v1096 = vand.u32 %v411, 4294901760
        %1097 = vmatmul.mubr.f32.gmra.mrb[0].mxu0 %v1096
        %v1098 = vpop.f32.mrb[0].mxu0
        %v1099 = vadd.f32 %v998, %v1098
        %v1100 = vpop.f32.mrb[0].mxu0
        %v1101 = vadd.f32 %v1000, %v1100
        %1102 = vmatprep.mubr.f32.mxu0 0.0
        %v1103 = vand.u32 %v414, 4294901760
        %1104 = vmatmul.mubr.f32.gmra.mrb[0].mxu0 %v1103
        %v1105 = vpop.f32.mrb[0].mxu0
        %v1106 = vadd.f32 %v1005, %v1105
        %v1107 = vpop.f32.mrb[0].mxu0
        %v1108 = vadd.f32 %v1007, %v1107
        %1109 = vdwg.mxu0
        %1110 = vst [vmem:[%s176] sm:$0xff] %v1085
        %vm1111 = vcmask 523264
        %1112 = vst.msk [vmem:[%s176 + $0x8] sm:$0xff] %vm1111, %v1087
        %1113 = vst [vmem:[%s176 + $0x10] sm:$0xff] %v1092
        %1114 = vst.msk [vmem:[%s176 + $0x18] sm:$0xff] %vm1111, %v1094
        %1115 = vst [vmem:[%s176 + $0x20] sm:$0xff] %v1099
        %1116 = vst.msk [vmem:[%s176 + $0x28] sm:$0xff] %vm1111, %v1101
        %1117 = vst [vmem:[%s176 + $0x30] sm:$0x3f] %v1106
        %vm1118 = vcmask 521216
        %1119 = vst.msk [vmem:[%s176 + $0x38] sm:$0x3f] %vm1118, %v1108
        %p1120 = scmp.lt.s32.totalorder %s17, 1
        %s1121 = scalar_select %p1120, %s17, 1
        %s1122 = smul.addr %s1121, 8
        %s1123 = smul.addr %s1122, 8
        %s1124 = scalar_lea.vmem %s2, %s1123
        // Predicated region
        $region37: #{tpu_custom_call.1} parent=27 // pred_check
          %p1125 = pneg %p82
        $region38: #{tpu_custom_call.1} parent=27 // pred_check_branch
          %1127 = sbr.rel (%p1125) target = $region40
        $region39: #{tpu_custom_call.1} parent=27 // pred_region
          _
        $region40: #{tpu_custom_call.1} parent=27 // pred_fallthru
          _
      $region28: #{tpu_custom_call.1} parent=5 // pred_fallthru
        _
      %p1128 = scmp.le.s32.totalorder 2, %s12
      // Predicated region
      $region41: #{tpu_custom_call.1} parent=5 // pred_check
        %p1129 = pneg %p1128
      $region42: #{tpu_custom_call.1} parent=5 // pred_check_branch
        %1131 = sbr.rel (%p1129) target = $region44
      $region43: #{tpu_custom_call.1} parent=5 // pred_region
        %s1132 = ssub.s32 %s12, 2
        // Predicated region
        $region45: #{tpu_custom_call.1} parent=43 // pred_check
          %p1133 = pneg %p88
        $region46: #{tpu_custom_call.1} parent=43 // pred_check_branch
          %1135 = sbr.rel (%p1133) target = $region48
        $region47: #{tpu_custom_call.1} parent=43 // pred_region
          %p1136 = scmp.lt.s32.totalorder %s18, 1
          %s1137 = scalar_select %p1136, %s18, 1
          %s1138 = smul.addr %s1137, 8
          %s1139 = smul.addr %s1138, 8
          %s1140 = scalar_lea.vmem %s2, %s1139
        $region48: #{tpu_custom_call.1} parent=43 // pred_fallthru
          _
      $region44: #{tpu_custom_call.1} parent=5 // pred_fallthru
        _
    $region6: #{tpu_custom_call.1} parent=1 // loop_footer
      %s16 = sadd.s32 1, %s12
    $region7: #{tpu_custom_call.1} parent=1 // loop_footer_branch
      %11 = sbr.rel target = $region3
    $region8: #{tpu_custom_call.1} parent=1 // loop_exit
      _
    %1141 = vsyncpa [#allocation3], 1
    %s1142 = scalar_lea.sflag [#allocation3], 1
    %1143 = vsyncpa %s1142, 1
    %1144 = vsyncpa [#allocation5], 1

</llo_original>
